<compile_context>
chip_gen: v5e
topology: v5e:2x2
jax: 0.10.0
libtpu: 0.0.40
codegen_flags: <defaults>
</compile_context>

<pallas_src>
import functools

import jax
import jax.numpy as jnp
from jax.experimental import pallas as pl
from jax.experimental.pallas import tpu as pltpu

KH = KW = 3   # kernel_size=3, stride=1, pad=1 (module defaults)
LANE = 128    # TPU lane width
SUBLANE = 8   # TPU sublane width


def _round_up(x, m):
    return (x + m - 1) // m * m


def _conv_bn_relu_kernel(x_ref, w_ref, b_ref, o_ref, *, use_relu):
    """One (batch, row-tile) step of 3x3/s1/p1 conv + folded BN (+ReLU).

    x_ref: (1, H+2, Wpad, Cin_p)   zero-padded NHWC image (resident across row tiles)
    w_ref: (KH, KW*Cin_p, Cout_p)  width-lowered weights, BN scale pre-folded
    b_ref: (1, Cout_p)             folded BN shift
    o_ref: (1, TH, W, Cout_p)      lane-dense output row tile
    """
    _, TH, W, Cout_p = o_ref.shape
    Cin_p = x_ref.shape[3]

    t = pl.program_id(1)
    row0 = pl.multiple_of(t * TH, TH)

    # Row window incl. the 2-row halo.  The dynamic offset is on a slab axis
    # (not sublane/lane), so this is an aligned load.
    xwin = x_ref[0, pl.ds(row0, TH + 2)]                 # (TH+2, Wpad, Cin_p)

    # Width-lowered im2col: concat the 3 width taps along the channel (lane)
    # axis.  Each part is a multiple of 128 lanes and W % 8 == 0, so the
    # concat / reshape below stay tile-aligned.  Built once, reused for all
    # 3 vertical taps.
    low = jnp.concatenate(
        [xwin[:, kw:kw + W, :] for kw in range(KW)], axis=-1
    )                                                    # (TH+2, W, KW*Cin_p)

    # 3 fat MXU matmuls (K = KW*Cin_p, N = Cout_p); operands stay in the input
    # dtype, accumulation in f32.  acc = 128x128 f32 -> 16 vregs, no spill.
    # BN shift is the accumulator's initial value (saves an epilogue add).
    acc = jnp.broadcast_to(b_ref[0].astype(jnp.float32), (TH * W, Cout_p))
    for kh in range(KH):
        patch = low[kh:kh + TH].reshape(TH * W, KW * Cin_p)
        acc = acc + jnp.dot(patch, w_ref[kh], preferred_element_type=jnp.float32)

    if use_relu:
        acc = jnp.maximum(acc, 0.0)
    o_ref[0] = acc.reshape(TH, W, Cout_p).astype(o_ref.dtype)


@functools.partial(jax.jit, static_argnames=("eps", "use_relu"))
def conv_bn_relu(x_nchw, weight, gamma, beta, running_mean, running_var,
                 eps=1e-5, use_relu=True):
    """x_nchw: (N, Cin, H, W); weight: (Cout, Cin, KH, KW) — PyTorch layout."""
    N, Cin, H, W = x_nchw.shape
    Cout = weight.shape[0]
    dtype = x_nchw.dtype

    Cin_p = _round_up(max(Cin, LANE), LANE)     # lane-dense contraction dim
    Cout_p = _round_up(max(Cout, LANE), LANE)   # lane-dense output dim
    Wpad = _round_up(W + 2, SUBLANE)            # sublane-aligned padded width
    TH = SUBLANE if H % SUBLANE == 0 else H     # output row tile height
    # TODO(synk): for very large images, also bound *input* VMEM by switching
    # the x BlockSpec to element-indexed halo row tiles (or manual DMA) instead
    # of a whole resident image (needed on v7x 64 MiB VMEM at e.g. 224x224x256).

    # ---- one prep pass (fused under jit): NCHW->NHWC + spatial/channel pad ----
    x = jnp.transpose(x_nchw, (0, 2, 3, 1))
    x_pad = jnp.pad(x, ((0, 0), (1, 1), (1, Wpad - W - 1), (0, Cin_p - Cin)))

    # ---- fold BN (eval) into weights; width-lower to (KH, KW*Cin_p, Cout_p) ----
    scale = gamma / jnp.sqrt(running_var + eps)
    shift = beta - running_mean * scale
    scale_p = jnp.pad(scale, (0, Cout_p - Cout))
    shift_p = jnp.pad(shift, (0, Cout_p - Cout))
    w = jnp.transpose(weight, (2, 3, 1, 0))                          # (KH,KW,Cin,Cout)
    w = jnp.pad(w, ((0, 0), (0, 0), (0, Cin_p - Cin), (0, Cout_p - Cout)))
    w = (w * scale_p[None, None, None, :]).astype(dtype)             # fold BN scale
    w_low = w.reshape(KH, KW * Cin_p, Cout_p)                        # width-lowered
    shift2 = shift_p.reshape(1, Cout_p).astype(jnp.float32)

    itemsize = jnp.dtype(dtype).itemsize
    cost = pl.CostEstimate(
        flops=2 * N * H * W * Cout_p * KH * KW * Cin_p,
        transcendentals=0,
        bytes_accessed=(x_pad.size * itemsize + w_low.size * itemsize
                        + N * H * W * Cout_p * itemsize),
    )

    out_nhwc = pl.pallas_call(
        functools.partial(_conv_bn_relu_kernel, use_relu=use_relu),
        out_shape=jax.ShapeDtypeStruct((N, H, W, Cout_p), dtype),
        grid_spec=pltpu.PrefetchScalarGridSpec(
            num_scalar_prefetch=0,
            grid=(N, H // TH),
            in_specs=[
                # whole padded image per batch element; index_map ignores the
                # row-tile axis -> block stays resident (one HBM read / image)
                pl.BlockSpec((1, H + 2, Wpad, Cin_p), lambda n, t: (n, 0, 0, 0)),
                pl.BlockSpec((KH, KW * Cin_p, Cout_p), lambda n, t: (0, 0, 0)),
                pl.BlockSpec((1, Cout_p), lambda n, t: (0, 0)),
            ],
            out_specs=pl.BlockSpec((1, TH, W, Cout_p), lambda n, t: (n, t, 0, 0)),
        ),
        compiler_params=pltpu.CompilerParams(
            # two parallel axes: keeps both v7x TensorCores busy even at N=1
            dimension_semantics=("parallel", "parallel")),
        cost_estimate=cost,
    )(x_pad, w_low, shift2)

    out = out_nhwc[..., :Cout]                 # drop lane padding
    return jnp.transpose(out, (0, 3, 1, 2))    # back to NCHW


def _reference(x_nchw, weight, gamma, beta, mean, var, eps=1e-5, use_relu=True):
    y = jax.lax.conv_general_dilated(
        x_nchw, weight, window_strides=(1, 1), padding=((1, 1), (1, 1)),
        dimension_numbers=("NCHW", "OIHW", "NCHW"))
    s = (gamma / jnp.sqrt(var + eps)).reshape(1, -1, 1, 1)
    b = (beta - mean * gamma / jnp.sqrt(var + eps)).reshape(1, -1, 1, 1)
    y = y * s + b
    return jnp.maximum(y, 0.0) if use_relu else y


if __name__ == "__main__":
    key = jax.random.PRNGKey(0)
    N, Cin, Cout, H, W = 2, 4, 8, 16, 16

    k1, k2, k3, k4, k5, k6 = jax.random.split(key, 6)
    x = jax.random.normal(k1, (N, Cin, H, W), jnp.float32)
    weight = jax.random.normal(k2, (Cout, Cin, KH, KW), jnp.float32) * 0.1
    gamma = 1.0 + 0.1 * jax.random.normal(k3, (Cout,), jnp.float32)
    beta = 0.1 * jax.random.normal(k4, (Cout,), jnp.float32)
    running_mean = 0.1 * jax.random.normal(k5, (Cout,), jnp.float32)
    running_var = jnp.abs(1.0 + 0.1 * jax.random.normal(k6, (Cout,), jnp.float32))

    out = conv_bn_relu(x, weight, gamma, beta, running_mean, running_var)
    out = jax.block_until_ready(out)

    ref = _reference(x, weight, gamma, beta, running_mean, running_var)
    assert out.shape == (N, Cout, H, W)
    assert jnp.allclose(out, ref, atol=1e-4, rtol=1e-4), "mismatch vs reference"

    print("KERNEL_OK")
</pallas_src>

<mosaic_0001>
module attributes {stable_mosaic.version = 11 : i64} {
  func.func @_conv_bn_relu_kernel(%arg0: i32, %arg1: i32, %arg2: memref<1x18x24x128xf32, #tpu.memory_space<vmem>>, %arg3: memref<3x384x128xf32, #tpu.memory_space<vmem>>, %arg4: memref<1x128xf32, #tpu.memory_space<vmem>>, %arg5: memref<1x8x16x128xf32, #tpu.memory_space<vmem>>) attributes {dimension_semantics = [#tpu.dimension_semantics<parallel>, #tpu.dimension_semantics<parallel>], iteration_bounds = array<i64: 2, 2>, scalar_prefetch = 0 : i64, scratch_operands = 0 : i64, tpu.core_type = #tpu.core_type<tc>, window_params = [{transform_indices = @transform_0, window_bounds = array<i64: 1, 18, 24, 128>}, {pipeline_mode = #tpu.pipeline_mode<synchronous>, transform_indices = @transform_1, window_bounds = array<i64: 3, 384, 128>}, {pipeline_mode = #tpu.pipeline_mode<synchronous>, transform_indices = @transform_2, window_bounds = array<i64: 1, 128>}, {transform_indices = @transform_3, window_bounds = array<i64: 1, 8, 16, 128>}]} {
    %c8_i32 = arith.constant 8 : i32
    %0 = arith.muli %arg1, %c8_i32 : i32
    %1 = tpu.assume_multiple %0, 8 : i32
    %c0 = arith.constant 0 : index
    %2 = arith.index_cast %1 : i32 to index
    %c0_0 = arith.constant 0 : index
    %c0_1 = arith.constant 0 : index
    %3 = vector.load %arg2[%c0, %2, %c0_0, %c0_1] : memref<1x18x24x128xf32, #tpu.memory_space<vmem>>, vector<1x10x24x128xf32>
    %4 = vector.shape_cast %3 : vector<1x10x24x128xf32> to vector<10x24x128xf32>
    %5 = vector.extract_strided_slice %4 {offsets = [0, 0, 0], sizes = [10, 16, 128], strides = [1, 1, 1]} : vector<10x24x128xf32> to vector<10x16x128xf32>
    %6 = vector.extract_strided_slice %4 {offsets = [0, 1, 0], sizes = [10, 16, 128], strides = [1, 1, 1]} : vector<10x24x128xf32> to vector<10x16x128xf32>
    %7 = vector.extract_strided_slice %4 {offsets = [0, 2, 0], sizes = [10, 16, 128], strides = [1, 1, 1]} : vector<10x24x128xf32> to vector<10x16x128xf32>
    %8 = tpu.concatenate %5, %6, %7 in 2 : vector<10x16x128xf32>, vector<10x16x128xf32>, vector<10x16x128xf32> -> vector<10x16x384xf32>
    %c0_2 = arith.constant 0 : index
    %c0_3 = arith.constant 0 : index
    %9 = vector.load %arg4[%c0_2, %c0_3] : memref<1x128xf32, #tpu.memory_space<vmem>>, vector<1x128xf32>
    %10 = vector.shape_cast %9 : vector<1x128xf32> to vector<128xf32>
    %11 = vector.shape_cast %10 : vector<128xf32> to vector<1x128xf32>
    %12 = vector.broadcast %11 : vector<1x128xf32> to vector<128x128xf32>
    %13 = vector.extract_strided_slice %8 {offsets = [0, 0, 0], sizes = [8, 16, 384], strides = [1, 1, 1]} : vector<10x16x384xf32> to vector<8x16x384xf32>
    %14 = vector.shape_cast %13 : vector<8x16x384xf32> to vector<128x384xf32>
    %c0_4 = arith.constant 0 : index
    %c0_5 = arith.constant 0 : index
    %c0_6 = arith.constant 0 : index
    %15 = vector.load %arg3[%c0_4, %c0_5, %c0_6] : memref<3x384x128xf32, #tpu.memory_space<vmem>>, vector<1x384x128xf32>
    %16 = vector.shape_cast %15 : vector<1x384x128xf32> to vector<384x128xf32>
    %cst = arith.constant dense<0.000000e+00> : vector<128x128xf32>
    %17 = tpu.matmul %14, %16, %cst {dimension_numbers = #tpu.dot_dimension_numbers<[1], [0], [0], [1], [0, 0, 1, 1], [], []>} : vector<128x384xf32>, vector<384x128xf32>, vector<128x128xf32> -> vector<128x128xf32>
    %18 = arith.addf %12, %17 : vector<128x128xf32>
    %19 = vector.extract_strided_slice %8 {offsets = [1, 0, 0], sizes = [8, 16, 384], strides = [1, 1, 1]} : vector<10x16x384xf32> to vector<8x16x384xf32>
    %20 = vector.shape_cast %19 : vector<8x16x384xf32> to vector<128x384xf32>
    %c1 = arith.constant 1 : index
    %c0_7 = arith.constant 0 : index
    %c0_8 = arith.constant 0 : index
    %21 = vector.load %arg3[%c1, %c0_7, %c0_8] : memref<3x384x128xf32, #tpu.memory_space<vmem>>, vector<1x384x128xf32>
    %22 = vector.shape_cast %21 : vector<1x384x128xf32> to vector<384x128xf32>
    %cst_9 = arith.constant dense<0.000000e+00> : vector<128x128xf32>
    %23 = tpu.matmul %20, %22, %cst_9 {dimension_numbers = #tpu.dot_dimension_numbers<[1], [0], [0], [1], [0, 0, 1, 1], [], []>} : vector<128x384xf32>, vector<384x128xf32>, vector<128x128xf32> -> vector<128x128xf32>
    %24 = arith.addf %18, %23 : vector<128x128xf32>
    %25 = vector.extract_strided_slice %8 {offsets = [2, 0, 0], sizes = [8, 16, 384], strides = [1, 1, 1]} : vector<10x16x384xf32> to vector<8x16x384xf32>
    %26 = vector.shape_cast %25 : vector<8x16x384xf32> to vector<128x384xf32>
    %c2 = arith.constant 2 : index
    %c0_10 = arith.constant 0 : index
    %c0_11 = arith.constant 0 : index
    %27 = vector.load %arg3[%c2, %c0_10, %c0_11] : memref<3x384x128xf32, #tpu.memory_space<vmem>>, vector<1x384x128xf32>
    %28 = vector.shape_cast %27 : vector<1x384x128xf32> to vector<384x128xf32>
    %cst_12 = arith.constant dense<0.000000e+00> : vector<128x128xf32>
    %29 = tpu.matmul %26, %28, %cst_12 {dimension_numbers = #tpu.dot_dimension_numbers<[1], [0], [0], [1], [0, 0, 1, 1], [], []>} : vector<128x384xf32>, vector<384x128xf32>, vector<128x128xf32> -> vector<128x128xf32>
    %30 = arith.addf %24, %29 : vector<128x128xf32>
    %cst_13 = arith.constant 0.000000e+00 : f32
    %31 = vector.broadcast %cst_13 : f32 to vector<128x128xf32>
    %32 = arith.maximumf %30, %31 : vector<128x128xf32>
    %33 = vector.shape_cast %32 : vector<128x128xf32> to vector<8x16x128xf32>
    %c0_14 = arith.constant 0 : index
    %c0_15 = arith.constant 0 : index
    %c0_16 = arith.constant 0 : index
    %c0_17 = arith.constant 0 : index
    %34 = vector.load %arg5[%c0_14, %c0_15, %c0_16, %c0_17] : memref<1x8x16x128xf32, #tpu.memory_space<vmem>>, vector<1x8x16x128xf32>
    %35 = vector.shape_cast %34 : vector<1x8x16x128xf32> to vector<8x16x128xf32>
    %36 = vector.shape_cast %33 : vector<8x16x128xf32> to vector<1x8x16x128xf32>
    tpu.vector_store %arg5[%c0_14, %c0_15, %c0_16, %c0_17], %36 {strides = array<i32>} : memref<1x8x16x128xf32, #tpu.memory_space<vmem>>, vector<1x8x16x128xf32>,
    return
  }
  func.func @transform_0(%arg0: i32, %arg1: i32) -> (i32, i32, i32, i32) {
    %c0_i32 = arith.constant 0 : i32
    %c0_i32_0 = arith.constant 0 : i32
    %c0_i32_1 = arith.constant 0 : i32
    %c0_i32_2 = arith.constant 0 : i32
    return %arg0, %c0_i32, %c0_i32_0, %c0_i32_1 : i32, i32, i32, i32
  }
  func.func @transform_1(%arg0: i32, %arg1: i32) -> (i32, i32, i32) {
    %c0_i32 = arith.constant 0 : i32
    %c0_i32_0 = arith.constant 0 : i32
    %c0_i32_1 = arith.constant 0 : i32
    %c0_i32_2 = arith.constant 0 : i32
    return %c0_i32, %c0_i32_0, %c0_i32_1 : i32, i32, i32
  }
  func.func @transform_2(%arg0: i32, %arg1: i32) -> (i32, i32) {
    %c0_i32 = arith.constant 0 : i32
    %c0_i32_0 = arith.constant 0 : i32
    %c0_i32_1 = arith.constant 0 : i32
    return %c0_i32, %c0_i32_0 : i32, i32
  }
  func.func @transform_3(%arg0: i32, %arg1: i32) -> (i32, i32, i32, i32) {
    %c0_i32 = arith.constant 0 : i32
    %c0_i32_0 = arith.constant 0 : i32
    %c0_i32_1 = arith.constant 0 : i32
    return %arg0, %arg1, %c0_i32, %c0_i32_0 : i32, i32, i32, i32
  }
}

</mosaic_0001>

<llo_original>
// kernel: conv_bn_relu.1
$region0: #{conv_bn_relu.1}
  #allocation0 [shape = 'u32[]', space=smem, size = 0x4, offset = 0x4, fixed_abs, tag = 'smem constant byte address 0x4 - core index']
  #allocation1 [shape = 'u32[72,128]{1,0:T(1,128)}', space=vmem, size = 0x9000, scoped, tag = 'internal scratch']
  %s0 = inlined_call_operand.vmem [shape: f32[2,18,24,128], index: 0, kind: input, shape index: {}]
  %s1 = inlined_call_operand.vmem [shape: f32[3,384,128], index: 1, kind: input, shape index: {}]
  %s2 = inlined_call_operand.vmem [shape: f32[1,128], index: 2, kind: input, shape index: {}]
  %s3 = inlined_call_operand.vmem [shape: f32[2,16,16,128], index: 3, kind: output, shape index: {}]
  %s4 = sld [smem:[#allocation0]]
  $region45: #{conv_bn_relu.1} parent=0
    _
  %s6 = ssub.s32 1, %s4
  %s7 = scalar_select 0, %s6, %s4
  loop: start=0, step=1, limit=6
  $region2: #{conv_bn_relu.1} parent=0 // loop_pre_header
    _
  $region3: #{conv_bn_relu.1} parent=0 // loop_header
    %s9 = sphi 0, %s13
    %p10 = scmp.ge.s32.totalorder %s9, 6
    %s16 = sphi 0, %s28
    %s17 = sphi 0, %s24
    %s18 = sphi 0, %s16
    %s19 = sphi 0, %s17
    %s20 = sphi 0, %s18
    %s21 = sphi 0, %s19
    %s31 = sphi 0, %s33
    %s34 = sphi 0, %s31
    %s35 = sphi 0, %s34
    %s51 = sphi 0, %s35
    %s55 = sphi 0, %s55
    %s57 = sphi 0, %s55
    %s58 = sphi 0, %s57
    %s72 = sphi 0, %s58
    %s76 = sphi 0, %s76
    %s78 = sphi 0, %s76
    %s79 = sphi 0, %s78
    %s93 = sphi 0, %s79
    %s101 = sphi 0, %s103
    %s104 = sphi 0, %s101
    %s105 = sphi 0, %s104
    %s121 = sphi 0, %s105
  $region4: #{conv_bn_relu.1} parent=0 // loop_header_branch
    %12 = sbr.rel (%p10) target = $region8
  $region5: #{conv_bn_relu.1} parent=0 // loop_body
    %s14 = ssub.s32 %s9, 1
    %s15 = ssub.s32 %s9, 2
    %s22 = sadd.s32 1, %s17
    %p23 = scmp.ge.s32.totalorder %s22, 2
    %s24 = scalar_select %p23, 0, %s22
    %s25 = sadd.s32 1, %s16
    %s26 = scalar_select %p23, %s25, %s16
    %p27 = scmp.ge.s32.totalorder %s26, 2
    %s28 = scalar_select %p27, 0, %s26
    %s29 = ssub.s32 %s16, %s28
    %p30 = scmp.eq.s32.totalorder %s29, 0
    %s32 = sadd.s32 %s31, 1
    %s33 = scalar_select %p30, %s31, %s32
    %p36 = pneg %p30
    %p37 = scmp.eq.s32.totalorder %s9, 3
    %p38 = por %p36, %p37
    %p39 = scmp.ne.s32.totalorder %s31, %s34
    %p40 = scmp.eq.s32.totalorder %s9, 0
    %p41 = por %p39, %p40
    %p42 = scmp.ne.s32.totalorder %s31, %s34
    %p43 = scmp.eq.s32.totalorder %s14, 3
    %p44 = por %p42, %p43
    %p45 = scmp.ne.s32.totalorder %s34, %s35
    %p46 = scmp.eq.s32.totalorder %s14, 0
    %p47 = por %p45, %p46
    %p48 = scmp.ne.s32.totalorder %s34, %s35
    %p49 = scmp.eq.s32.totalorder %s15, 3
    %p50 = por %p48, %p49
    %p52 = scmp.ne.s32.totalorder %s35, %s51
    %p53 = scmp.eq.s32.totalorder %s15, 0
    %p54 = por %p52, %p53
    %s56 = sadd.s32 %s55, 1
    %p59 = scmp.eq.s32.totalorder %s9, 3
    %p60 = scmp.ne.s32.totalorder %s55, %s57
    %p61 = scmp.eq.s32.totalorder %s9, 0
    %p62 = por %p60, %p61
    %p63 = scmp.ne.s32.totalorder %s55, %s57
    %p64 = scmp.eq.s32.totalorder %s14, 3
    %p65 = por %p63, %p64
    %p66 = scmp.ne.s32.totalorder %s57, %s58
    %p67 = scmp.eq.s32.totalorder %s14, 0
    %p68 = por %p66, %p67
    %p69 = scmp.ne.s32.totalorder %s57, %s58
    %p70 = scmp.eq.s32.totalorder %s15, 3
    %p71 = por %p69, %p70
    %p73 = scmp.ne.s32.totalorder %s58, %s72
    %p74 = scmp.eq.s32.totalorder %s15, 0
    %p75 = por %p73, %p74
    %s77 = sadd.s32 %s76, 1
    %p80 = scmp.eq.s32.totalorder %s9, 3
    %p81 = scmp.ne.s32.totalorder %s76, %s78
    %p82 = scmp.eq.s32.totalorder %s9, 0
    %p83 = por %p81, %p82
    %p84 = scmp.ne.s32.totalorder %s76, %s78
    %p85 = scmp.eq.s32.totalorder %s14, 3
    %p86 = por %p84, %p85
    %p87 = scmp.ne.s32.totalorder %s78, %s79
    %p88 = scmp.eq.s32.totalorder %s14, 0
    %p89 = por %p87, %p88
    %p90 = scmp.ne.s32.totalorder %s78, %s79
    %p91 = scmp.eq.s32.totalorder %s15, 3
    %p92 = por %p90, %p91
    %p94 = scmp.ne.s32.totalorder %s79, %s93
    %p95 = scmp.eq.s32.totalorder %s15, 0
    %p96 = por %p94, %p95
    %s97 = ssub.s32 %s16, %s28
    %s98 = ssub.s32 %s17, %s24
    %s99 = sor.u32 %s97, %s98
    %p100 = scmp.eq.s32.totalorder %s99, 0
    %s102 = sadd.s32 %s101, 1
    %s103 = scalar_select %p100, %s101, %s102
    %p106 = pneg %p100
    %p107 = scmp.eq.s32.totalorder %s9, 3
    %p108 = por %p106, %p107
    %p109 = scmp.ne.s32.totalorder %s101, %s104
    %p110 = scmp.eq.s32.totalorder %s9, 0
    %p111 = por %p109, %p110
    %p112 = scmp.ne.s32.totalorder %s101, %s104
    %p113 = scmp.eq.s32.totalorder %s14, 3
    %p114 = por %p112, %p113
    %p115 = scmp.ne.s32.totalorder %s104, %s105
    %p116 = scmp.eq.s32.totalorder %s14, 0
    %p117 = por %p115, %p116
    %p118 = scmp.ne.s32.totalorder %s104, %s105
    %p119 = scmp.eq.s32.totalorder %s15, 3
    %p120 = por %p118, %p119
    %p122 = scmp.ne.s32.totalorder %s105, %s121
    %p123 = scmp.eq.s32.totalorder %s15, 0
    %p124 = por %p122, %p123
    %p125 = scmp.le.s32.totalorder 1, %s9
    %p126 = scmp.lt.s32.totalorder %s9, 5
    %p127 = pnand %p125, %p126
    %p128 = pneg %p127
    // Predicated region
    $region9: #{conv_bn_relu.1} parent=5 // pred_check
      _
    $region10: #{conv_bn_relu.1} parent=5 // pred_check_branch
      %130 = sbr.rel (%p127) target = $region12
    $region11: #{conv_bn_relu.1} parent=5 // pred_region
      %s131 = ssub.s32 %s9, 1
      // Predicated region
      $region13: #{conv_bn_relu.1} parent=11 // pred_check
        %p132 = pneg %p68
      $region14: #{conv_bn_relu.1} parent=11 // pred_check_branch
        %134 = sbr.rel (%p132) target = $region16
      $region15: #{conv_bn_relu.1} parent=11 // pred_region
        _
      $region16: #{conv_bn_relu.1} parent=11 // pred_fallthru
        _
      // Predicated region
      $region17: #{conv_bn_relu.1} parent=11 // pred_check
        %p135 = pneg %p89
      $region18: #{conv_bn_relu.1} parent=11 // pred_check_branch
        %137 = sbr.rel (%p135) target = $region20
      $region19: #{conv_bn_relu.1} parent=11 // pred_region
        _
      $region20: #{conv_bn_relu.1} parent=11 // pred_fallthru
        _
    $region12: #{conv_bn_relu.1} parent=5 // pred_fallthru
      _
    %p138 = scmp.lt.s32.totalorder %s9, 4
    // Predicated region
    $region21: #{conv_bn_relu.1} parent=5 // pred_check
      %p139 = pneg %p138
    $region22: #{conv_bn_relu.1} parent=5 // pred_check_branch
      %141 = sbr.rel (%p139) target = $region24
    $region23: #{conv_bn_relu.1} parent=5 // pred_region
      // Predicated region
      $region25: #{conv_bn_relu.1} parent=23 // pred_check
        %p142 = pneg %p41
      $region26: #{conv_bn_relu.1} parent=23 // pred_check_branch
        %144 = sbr.rel (%p142) target = $region28
      $region27: #{conv_bn_relu.1} parent=23 // pred_region
        %p145 = scmp.lt.s32.totalorder %s16, 1
        %s146 = scalar_select %p145, %s16, 1
        %s147 = smul.addr %s146, 54
        %s148 = smul.addr %s147, 8
        %s149 = scalar_lea.vmem %s0, %s148
      $region28: #{conv_bn_relu.1} parent=23 // pred_fallthru
        _
    $region24: #{conv_bn_relu.1} parent=5 // pred_fallthru
      _
    %p150 = scmp.le.s32.totalorder 1, %s9
    %p151 = scmp.lt.s32.totalorder %s9, 5
    %p152 = pnand %p150, %p151
    %p153 = pneg %p152
    // Predicated region
    $region29: #{conv_bn_relu.1} parent=5 // pred_check
      _
    $region30: #{conv_bn_relu.1} parent=5 // pred_check_branch
      %155 = sbr.rel (%p152) target = $region32
    $region31: #{conv_bn_relu.1} parent=5 // pred_region
      %s156 = ssub.s32 %s9, 1
      %p157 = scmp.lt.s32.totalorder %s18, 1
      %s158 = scalar_select %p157, %s18, 1
      %s159 = smul.addr %s158, 54
      %s160 = smul.addr %s159, 8
      %s161 = scalar_lea.vmem %s0, %s160
      %p162 = pneg %p47
      %p163 = pneg %p44
      %p164 = pneg %p68
      %p165 = pneg %p65
      %p166 = pneg %p89
      %p167 = pneg %p86
      %p168 = pneg %p117
      %p169 = pneg %p114
      %s170 = smul.u32 8, %s19
      %p171 = scmp.lt.s32.totalorder %s18, 1
      %s172 = scalar_select %p171, %s18, 1
      %p173 = scmp.lt.s32.totalorder %s170, 15
      %s174 = scalar_select %p173, %s170, 15
      %s175 = smul.addr %s174, 2
      %s176 = smul.addr %s172, 32
      %s177 = sadd.s32 %s175, %s176
      %s178 = smul.addr %s177, 8
      %s179 = scalar_lea.vmem %s3, %s178
      %p180 = scmp.lt.s32.totalorder %s18, 1
      %s181 = scalar_select %p180, %s18, 1
      %s182 = smul.addr %s181, 54
      %s183 = smul.addr %s182, 8
      %s184 = scalar_lea.vmem %s0, %s183
      %s185 = smul.u32 8, %s19
      %p186 = scmp.lt.s32.totalorder %s18, 1
      %s187 = scalar_select %p186, %s18, 1
      %p188 = scmp.lt.s32.totalorder %s185, 15
      %s189 = scalar_select %p188, %s185, 15
      %s190 = smul.addr %s189, 2
      %s191 = smul.addr %s187, 32
      %s192 = sadd.s32 %s190, %s191
      %s193 = smul.addr %s192, 8
      %s194 = scalar_lea.vmem %s3, %s193
      %s195 = smul.u32 8, %s19
      %s196 = smul.u32 %s19, 8
      %s197 = smul.u32 %s196, 24
      %s198 = scalar_lea.vmem %s184, %s197
      %v199 = vld [vmem:[%s198] sm:$0xff]
      %v200 = vld [vmem:[%s198 + $0x8] sm:$0xff]
      %v201 = vld [vmem:[%s198 + $0x10] sm:$0xff]
      %v202 = vld [vmem:[%s198 + $0x18] sm:$0xff]
      %v203 = vld [vmem:[%s198 + $0x20] sm:$0xff]
      %v204 = vld [vmem:[%s198 + $0x28] sm:$0xff]
      %v205 = vld [vmem:[%s198 + $0x30] sm:$0xff]
      %v206 = vld [vmem:[%s198 + $0x38] sm:$0xff]
      %v207 = vld [vmem:[%s198 + $0x40] sm:$0xff]
      %v208 = vld [vmem:[%s198 + $0x48] sm:$0xff]
      %v209 = vld [vmem:[%s198 + $0x50] sm:$0xff]
      %v210 = vld [vmem:[%s198 + $0x58] sm:$0xff]
      %v211 = vld [vmem:[%s198 + $0x60] sm:$0xff]
      %v212 = vld [vmem:[%s198 + $0x68] sm:$0xff]
      %v213 = vld [vmem:[%s198 + $0x70] sm:$0xff]
      %v214 = vld [vmem:[%s198 + $0x78] sm:$0xff]
      %v215 = vld [vmem:[%s198 + $0x80] sm:$0xff]
      %v216 = vld [vmem:[%s198 + $0x88] sm:$0xff]
      %v217 = vld [vmem:[%s198 + $0x90] sm:$0xff]
      %v218 = vld [vmem:[%s198 + $0x98] sm:$0xff]
      %v219 = vld [vmem:[%s198 + $0xa0] sm:$0xff]
      %v220 = vld [vmem:[%s198 + $0xa8] sm:$0xff]
      %v221 = vld [vmem:[%s198 + $0xb0] sm:$0xff]
      %v222 = vld [vmem:[%s198 + $0xb8] sm:$0xff]
      %v223 = vld [vmem:[%s198 + $0xc0] sm:$0xff]
      %v224 = vld [vmem:[%s198 + $0xc8] sm:$0xff]
      %v225 = vld [vmem:[%s198 + $0xd0] sm:$0xff]
      %v226 = vld [vmem:[%s198 + $0xd8] sm:$0xff]
      %v227 = vld [vmem:[%s198 + $0xe0] sm:$0xff]
      %v228 = vld [vmem:[%s198 + $0xe8] sm:$0xff]
      %vm259 = vcmask 1046528
      %v260 = vrot.slane %v199, 1
      %v261 = vrot.slane %v200, 1
      %v262 = vsel %vm259, %v260, %v261
      %v263 = vrot.slane %v201, 1
      %v264 = vsel %vm259, %v261, %v263
      %v265 = vrot.slane %v202, 1
      %v266 = vrot.slane %v203, 1
      %v267 = vsel %vm259, %v265, %v266
      %v268 = vrot.slane %v204, 1
      %v269 = vsel %vm259, %v266, %v268
      %v270 = vrot.slane %v205, 1
      %v271 = vrot.slane %v206, 1
      %v272 = vsel %vm259, %v270, %v271
      %v273 = vrot.slane %v207, 1
      %v274 = vsel %vm259, %v271, %v273
      %v275 = vrot.slane %v208, 1
      %v276 = vrot.slane %v209, 1
      %v277 = vsel %vm259, %v275, %v276
      %v278 = vrot.slane %v210, 1
      %v279 = vsel %vm259, %v276, %v278
      %v280 = vrot.slane %v211, 1
      %v281 = vrot.slane %v212, 1
      %v282 = vsel %vm259, %v280, %v281
      %v283 = vrot.slane %v213, 1
      %v284 = vsel %vm259, %v281, %v283
      %v285 = vrot.slane %v214, 1
      %v286 = vrot.slane %v215, 1
      %v287 = vsel %vm259, %v285, %v286
      %v288 = vrot.slane %v216, 1
      %v289 = vsel %vm259, %v286, %v288
      %v290 = vrot.slane %v217, 1
      %v291 = vrot.slane %v218, 1
      %v292 = vsel %vm259, %v290, %v291
      %v293 = vrot.slane %v219, 1
      %v294 = vsel %vm259, %v291, %v293
      %v295 = vrot.slane %v220, 1
      %v296 = vrot.slane %v221, 1
      %v297 = vsel %vm259, %v295, %v296
      %v298 = vrot.slane %v222, 1
      %v299 = vsel %vm259, %v296, %v298
      %v300 = vrot.slane %v223, 1
      %v301 = vrot.slane %v224, 1
      %v302 = vsel %vm259, %v300, %v301
      %v303 = vrot.slane %v225, 1
      %v304 = vsel %vm259, %v301, %v303
      %v305 = vrot.slane %v226, 1
      %v306 = vrot.slane %v227, 1
      %v307 = vsel %vm259, %v305, %v306
      %v308 = vrot.slane %v228, 1
      %v309 = vsel %vm259, %v306, %v308
      %vm330 = vcmask 1045504
      %v331 = vrot.slane %v199, 2
      %v332 = vrot.slane %v200, 2
      %v333 = vsel %vm330, %v331, %v332
      %v334 = vrot.slane %v201, 2
      %v335 = vsel %vm330, %v332, %v334
      %v336 = vrot.slane %v202, 2
      %v337 = vrot.slane %v203, 2
      %v338 = vsel %vm330, %v336, %v337
      %v339 = vrot.slane %v204, 2
      %v340 = vsel %vm330, %v337, %v339
      %v341 = vrot.slane %v205, 2
      %v342 = vrot.slane %v206, 2
      %v343 = vsel %vm330, %v341, %v342
      %v344 = vrot.slane %v207, 2
      %v345 = vsel %vm330, %v342, %v344
      %v346 = vrot.slane %v208, 2
      %v347 = vrot.slane %v209, 2
      %v348 = vsel %vm330, %v346, %v347
      %v349 = vrot.slane %v210, 2
      %v350 = vsel %vm330, %v347, %v349
      %v351 = vrot.slane %v211, 2
      %v352 = vrot.slane %v212, 2
      %v353 = vsel %vm330, %v351, %v352
      %v354 = vrot.slane %v213, 2
      %v355 = vsel %vm330, %v352, %v354
      %v356 = vrot.slane %v214, 2
      %v357 = vrot.slane %v215, 2
      %v358 = vsel %vm330, %v356, %v357
      %v359 = vrot.slane %v216, 2
      %v360 = vsel %vm330, %v357, %v359
      %v361 = vrot.slane %v217, 2
      %v362 = vrot.slane %v218, 2
      %v363 = vsel %vm330, %v361, %v362
      %v364 = vrot.slane %v219, 2
      %v365 = vsel %vm330, %v362, %v364
      %v366 = vrot.slane %v220, 2
      %v367 = vrot.slane %v221, 2
      %v368 = vsel %vm330, %v366, %v367
      %v369 = vrot.slane %v222, 2
      %v370 = vsel %vm330, %v367, %v369
      %v371 = vrot.slane %v223, 2
      %v372 = vrot.slane %v224, 2
      %v373 = vsel %vm330, %v371, %v372
      %v374 = vrot.slane %v225, 2
      %v375 = vsel %vm330, %v372, %v374
      %v376 = vrot.slane %v226, 2
      %v377 = vrot.slane %v227, 2
      %v378 = vsel %vm330, %v376, %v377
      %v379 = vrot.slane %v228, 2
      %v380 = vsel %vm330, %v377, %v379
      %v401 = vld [vmem:[%s2] sm:$0x1]
      %v403 = vperm.slane %v401, 0
      %v405 = vld [vmem:[%s1] sm:$0xff]
      %v406 = vld [vmem:[%s1 + $0x8] sm:$0xff]
      %v407 = vld [vmem:[%s1 + $0x10] sm:$0xff]
      %v408 = vld [vmem:[%s1 + $0x18] sm:$0xff]
      %v409 = vld [vmem:[%s1 + $0x20] sm:$0xff]
      %v410 = vld [vmem:[%s1 + $0x28] sm:$0xff]
      %v411 = vld [vmem:[%s1 + $0x30] sm:$0xff]
      %v412 = vld [vmem:[%s1 + $0x38] sm:$0xff]
      %v413 = vld [vmem:[%s1 + $0x40] sm:$0xff]
      %v414 = vld [vmem:[%s1 + $0x48] sm:$0xff]
      %v415 = vld [vmem:[%s1 + $0x50] sm:$0xff]
      %v416 = vld [vmem:[%s1 + $0x58] sm:$0xff]
      %v417 = vld [vmem:[%s1 + $0x60] sm:$0xff]
      %v418 = vld [vmem:[%s1 + $0x68] sm:$0xff]
      %v419 = vld [vmem:[%s1 + $0x70] sm:$0xff]
      %v420 = vld [vmem:[%s1 + $0x78] sm:$0xff]
      %v421 = vld [vmem:[%s1 + $0x80] sm:$0xff]
      %v422 = vld [vmem:[%s1 + $0x88] sm:$0xff]
      %v423 = vld [vmem:[%s1 + $0x90] sm:$0xff]
      %v424 = vld [vmem:[%s1 + $0x98] sm:$0xff]
      %v425 = vld [vmem:[%s1 + $0xa0] sm:$0xff]
      %v426 = vld [vmem:[%s1 + $0xa8] sm:$0xff]
      %v427 = vld [vmem:[%s1 + $0xb0] sm:$0xff]
      %v428 = vld [vmem:[%s1 + $0xb8] sm:$0xff]
      %v429 = vld [vmem:[%s1 + $0xc0] sm:$0xff]
      %v430 = vld [vmem:[%s1 + $0xc8] sm:$0xff]
      %v431 = vld [vmem:[%s1 + $0xd0] sm:$0xff]
      %v432 = vld [vmem:[%s1 + $0xd8] sm:$0xff]
      %v433 = vld [vmem:[%s1 + $0xe0] sm:$0xff]
      %v434 = vld [vmem:[%s1 + $0xe8] sm:$0xff]
      %v435 = vld [vmem:[%s1 + $0xf0] sm:$0xff]
      %v436 = vld [vmem:[%s1 + $0xf8] sm:$0xff]
      %v437 = vld [vmem:[%s1 + $0x100] sm:$0xff]
      %v438 = vld [vmem:[%s1 + $0x108] sm:$0xff]
      %v439 = vld [vmem:[%s1 + $0x110] sm:$0xff]
      %v440 = vld [vmem:[%s1 + $0x118] sm:$0xff]
      %v441 = vld [vmem:[%s1 + $0x120] sm:$0xff]
      %v442 = vld [vmem:[%s1 + $0x128] sm:$0xff]
      %v443 = vld [vmem:[%s1 + $0x130] sm:$0xff]
      %v444 = vld [vmem:[%s1 + $0x138] sm:$0xff]
      %v445 = vld [vmem:[%s1 + $0x140] sm:$0xff]
      %v446 = vld [vmem:[%s1 + $0x148] sm:$0xff]
      %v447 = vld [vmem:[%s1 + $0x150] sm:$0xff]
      %v448 = vld [vmem:[%s1 + $0x158] sm:$0xff]
      %v449 = vld [vmem:[%s1 + $0x160] sm:$0xff]
      %v450 = vld [vmem:[%s1 + $0x168] sm:$0xff]
      %v451 = vld [vmem:[%s1 + $0x170] sm:$0xff]
      %v452 = vld [vmem:[%s1 + $0x178] sm:$0xff]
      %453 = vmatpush.msra.mxu0 %v420
      %454 = vmatpush.msra.mxu0 %v419
      %455 = vmatpush.msra.mxu0 %v418
      %456 = vmatpush.msra.mxu0 %v417
      %457 = vmatpush.msra.mxu0 %v416
      %458 = vmatpush.msra.mxu0 %v415
      %459 = vmatpush.msra.mxu0 %v414
      %460 = vmatpush.msra.mxu0 %v413
      %461 = vmatpush.msra.mxu0 %v412
      %462 = vmatpush.msra.mxu0 %v411
      %463 = vmatpush.msra.mxu0 %v410
      %464 = vmatpush.msra.mxu0 %v409
      %465 = vmatpush.msra.mxu0 %v408
      %466 = vmatpush.msra.mxu0 %v407
      %467 = vmatpush.msra.mxu0 %v406
      %468 = vmatpush.msra.mxu0 %v405
      %469 = vmatmul.f32.gmra.mxu0 %v199
      %v470 = vpop.f32.mrf.mxu0
      %v471 = vadd.f32 0.0, %v470
      %472 = vmatmul.f32.gmra.mxu0 %v200
      %v473 = vpop.f32.mrf.mxu0
      %v474 = vadd.f32 0.0, %v473
      %475 = vmatmul.f32.gmra.mxu0 %v202
      %v476 = vpop.f32.mrf.mxu0
      %v477 = vadd.f32 0.0, %v476
      %478 = vmatmul.f32.gmra.mxu0 %v203
      %v479 = vpop.f32.mrf.mxu0
      %v480 = vadd.f32 0.0, %v479
      %481 = vmatmul.f32.gmra.mxu0 %v205
      %v482 = vpop.f32.mrf.mxu0
      %v483 = vadd.f32 0.0, %v482
      %484 = vmatmul.f32.gmra.mxu0 %v206
      %v485 = vpop.f32.mrf.mxu0
      %v486 = vadd.f32 0.0, %v485
      %487 = vmatmul.f32.gmra.mxu0 %v208
      %v488 = vpop.f32.mrf.mxu0
      %v489 = vadd.f32 0.0, %v488
      %490 = vmatmul.f32.gmra.mxu0 %v209
      %v491 = vpop.f32.mrf.mxu0
      %v492 = vadd.f32 0.0, %v491
      %493 = vmatmul.f32.gmra.mxu0 %v211
      %v494 = vpop.f32.mrf.mxu0
      %v495 = vadd.f32 0.0, %v494
      %496 = vmatmul.f32.gmra.mxu0 %v212
      %v497 = vpop.f32.mrf.mxu0
      %v498 = vadd.f32 0.0, %v497
      %499 = vmatmul.f32.gmra.mxu0 %v214
      %v500 = vpop.f32.mrf.mxu0
      %v501 = vadd.f32 0.0, %v500
      %502 = vmatmul.f32.gmra.mxu0 %v215
      %v503 = vpop.f32.mrf.mxu0
      %v504 = vadd.f32 0.0, %v503
      %505 = vmatmul.f32.gmra.mxu0 %v217
      %v506 = vpop.f32.mrf.mxu0
      %v507 = vadd.f32 0.0, %v506
      %508 = vmatmul.f32.gmra.mxu0 %v218
      %v509 = vpop.f32.mrf.mxu0
      %v510 = vadd.f32 0.0, %v509
      %511 = vmatmul.f32.gmra.mxu0 %v220
      %v512 = vpop.f32.mrf.mxu0
      %v513 = vadd.f32 0.0, %v512
      %514 = vmatmul.f32.gmra.mxu0 %v221
      %v515 = vpop.f32.mrf.mxu0
      %v516 = vadd.f32 0.0, %v515
      %517 = vdwg.mxu0
      %518 = vmatpush.msra.mxu0 %v436
      %519 = vmatpush.msra.mxu0 %v435
      %520 = vmatpush.msra.mxu0 %v434
      %521 = vmatpush.msra.mxu0 %v433
      %522 = vmatpush.msra.mxu0 %v432
      %523 = vmatpush.msra.mxu0 %v431
      %524 = vmatpush.msra.mxu0 %v430
      %525 = vmatpush.msra.mxu0 %v429
      %526 = vmatpush.msra.mxu0 %v428
      %527 = vmatpush.msra.mxu0 %v427
      %528 = vmatpush.msra.mxu0 %v426
      %529 = vmatpush.msra.mxu0 %v425
      %530 = vmatpush.msra.mxu0 %v424
      %531 = vmatpush.msra.mxu0 %v423
      %532 = vmatpush.msra.mxu0 %v422
      %533 = vmatpush.msra.mxu0 %v421
      %534 = vmatmul.f32.gmra.mxu0 %v262
      %v535 = vpop.f32.mrf.mxu0
      %v536 = vadd.f32 %v471, %v535
      %537 = vmatmul.f32.gmra.mxu0 %v264
      %v538 = vpop.f32.mrf.mxu0
      %v539 = vadd.f32 %v474, %v538
      %540 = vmatmul.f32.gmra.mxu0 %v267
      %v541 = vpop.f32.mrf.mxu0
      %v542 = vadd.f32 %v477, %v541
      %543 = vmatmul.f32.gmra.mxu0 %v269
      %v544 = vpop.f32.mrf.mxu0
      %v545 = vadd.f32 %v480, %v544
      %546 = vmatmul.f32.gmra.mxu0 %v272
      %v547 = vpop.f32.mrf.mxu0
      %v548 = vadd.f32 %v483, %v547
      %549 = vmatmul.f32.gmra.mxu0 %v274
      %v550 = vpop.f32.mrf.mxu0
      %v551 = vadd.f32 %v486, %v550
      %552 = vmatmul.f32.gmra.mxu0 %v277
      %v553 = vpop.f32.mrf.mxu0
      %v554 = vadd.f32 %v489, %v553
      %555 = vmatmul.f32.gmra.mxu0 %v279
      %v556 = vpop.f32.mrf.mxu0
      %v557 = vadd.f32 %v492, %v556
      %558 = vmatmul.f32.gmra.mxu0 %v282
      %v559 = vpop.f32.mrf.mxu0
      %v560 = vadd.f32 %v495, %v559
      %561 = vmatmul.f32.gmra.mxu0 %v284
      %v562 = vpop.f32.mrf.mxu0
      %v563 = vadd.f32 %v498, %v562
      %564 = vmatmul.f32.gmra.mxu0 %v287
      %v565 = vpop.f32.mrf.mxu0
      %v566 = vadd.f32 %v501, %v565
      %567 = vmatmul.f32.gmra.mxu0 %v289
      %v568 = vpop.f32.mrf.mxu0
      %v569 = vadd.f32 %v504, %v568
      %570 = vmatmul.f32.gmra.mxu0 %v292
      %v571 = vpop.f32.mrf.mxu0
      %v572 = vadd.f32 %v507, %v571
      %573 = vmatmul.f32.gmra.mxu0 %v294
      %v574 = vpop.f32.mrf.mxu0
      %v575 = vadd.f32 %v510, %v574
      %576 = vmatmul.f32.gmra.mxu0 %v297
      %v577 = vpop.f32.mrf.mxu0
      %v578 = vadd.f32 %v513, %v577
      %579 = vmatmul.f32.gmra.mxu0 %v299
      %v580 = vpop.f32.mrf.mxu0
      %v581 = vadd.f32 %v516, %v580
      %582 = vdwg.mxu0
      %583 = vmatpush.msra.mxu0 %v452
      %584 = vmatpush.msra.mxu0 %v451
      %585 = vmatpush.msra.mxu0 %v450
      %586 = vmatpush.msra.mxu0 %v449
      %587 = vmatpush.msra.mxu0 %v448
      %588 = vmatpush.msra.mxu0 %v447
      %589 = vmatpush.msra.mxu0 %v446
      %590 = vmatpush.msra.mxu0 %v445
      %591 = vmatpush.msra.mxu0 %v444
      %592 = vmatpush.msra.mxu0 %v443
      %593 = vmatpush.msra.mxu0 %v442
      %594 = vmatpush.msra.mxu0 %v441
      %595 = vmatpush.msra.mxu0 %v440
      %596 = vmatpush.msra.mxu0 %v439
      %597 = vmatpush.msra.mxu0 %v438
      %598 = vmatpush.msra.mxu0 %v437
      %599 = vmatmul.f32.gmra.mxu0 %v333
      %v600 = vpop.f32.mrf.mxu0
      %v601 = vadd.f32 %v536, %v600
      %602 = vmatmul.f32.gmra.mxu0 %v335
      %v603 = vpop.f32.mrf.mxu0
      %v604 = vadd.f32 %v539, %v603
      %605 = vmatmul.f32.gmra.mxu0 %v338
      %v606 = vpop.f32.mrf.mxu0
      %v607 = vadd.f32 %v542, %v606
      %608 = vmatmul.f32.gmra.mxu0 %v340
      %v609 = vpop.f32.mrf.mxu0
      %v610 = vadd.f32 %v545, %v609
      %611 = vmatmul.f32.gmra.mxu0 %v343
      %v612 = vpop.f32.mrf.mxu0
      %v613 = vadd.f32 %v548, %v612
      %614 = vmatmul.f32.gmra.mxu0 %v345
      %v615 = vpop.f32.mrf.mxu0
      %v616 = vadd.f32 %v551, %v615
      %617 = vmatmul.f32.gmra.mxu0 %v348
      %v618 = vpop.f32.mrf.mxu0
      %v619 = vadd.f32 %v554, %v618
      %620 = vmatmul.f32.gmra.mxu0 %v350
      %v621 = vpop.f32.mrf.mxu0
      %v622 = vadd.f32 %v557, %v621
      %623 = vmatmul.f32.gmra.mxu0 %v353
      %v624 = vpop.f32.mrf.mxu0
      %v625 = vadd.f32 %v560, %v624
      %626 = vmatmul.f32.gmra.mxu0 %v355
      %v627 = vpop.f32.mrf.mxu0
      %v628 = vadd.f32 %v563, %v627
      %629 = vmatmul.f32.gmra.mxu0 %v358
      %v630 = vpop.f32.mrf.mxu0
      %v631 = vadd.f32 %v566, %v630
      %632 = vmatmul.f32.gmra.mxu0 %v360
      %v633 = vpop.f32.mrf.mxu0
      %v634 = vadd.f32 %v569, %v633
      %635 = vmatmul.f32.gmra.mxu0 %v363
      %v636 = vpop.f32.mrf.mxu0
      %v637 = vadd.f32 %v572, %v636
      %638 = vmatmul.f32.gmra.mxu0 %v365
      %v639 = vpop.f32.mrf.mxu0
      %v640 = vadd.f32 %v575, %v639
      %641 = vmatmul.f32.gmra.mxu0 %v368
      %v642 = vpop.f32.mrf.mxu0
      %v643 = vadd.f32 %v578, %v642
      %644 = vmatmul.f32.gmra.mxu0 %v370
      %v645 = vpop.f32.mrf.mxu0
      %v646 = vadd.f32 %v581, %v645
      %647 = vdwg.mxu0
      %v648 = vadd.f32 %v403, %v601
      %v649 = vadd.f32 %v403, %v604
      %v650 = vadd.f32 %v403, %v607
      %v651 = vadd.f32 %v403, %v610
      %v652 = vadd.f32 %v403, %v613
      %v653 = vadd.f32 %v403, %v616
      %v654 = vadd.f32 %v403, %v619
      %v655 = vadd.f32 %v403, %v622
      %v656 = vadd.f32 %v403, %v625
      %v657 = vadd.f32 %v403, %v628
      %v658 = vadd.f32 %v403, %v631
      %v659 = vadd.f32 %v403, %v634
      %v660 = vadd.f32 %v403, %v637
      %v661 = vadd.f32 %v403, %v640
      %v662 = vadd.f32 %v403, %v643
      %v663 = vadd.f32 %v403, %v646
      %s664 = scalar_lea.vmem %s1, 384
      %v665 = vld [vmem:[%s664] sm:$0xff]
      %v666 = vld [vmem:[%s664 + $0x8] sm:$0xff]
      %v667 = vld [vmem:[%s664 + $0x10] sm:$0xff]
      %v668 = vld [vmem:[%s664 + $0x18] sm:$0xff]
      %v669 = vld [vmem:[%s664 + $0x20] sm:$0xff]
      %v670 = vld [vmem:[%s664 + $0x28] sm:$0xff]
      %v671 = vld [vmem:[%s664 + $0x30] sm:$0xff]
      %v672 = vld [vmem:[%s664 + $0x38] sm:$0xff]
      %v673 = vld [vmem:[%s664 + $0x40] sm:$0xff]
      %v674 = vld [vmem:[%s664 + $0x48] sm:$0xff]
      %v675 = vld [vmem:[%s664 + $0x50] sm:$0xff]
      %v676 = vld [vmem:[%s664 + $0x58] sm:$0xff]
      %v677 = vld [vmem:[%s664 + $0x60] sm:$0xff]
      %v678 = vld [vmem:[%s664 + $0x68] sm:$0xff]
      %v679 = vld [vmem:[%s664 + $0x70] sm:$0xff]
      %v680 = vld [vmem:[%s664 + $0x78] sm:$0xff]
      %v681 = vld [vmem:[%s664 + $0x80] sm:$0xff]
      %v682 = vld [vmem:[%s664 + $0x88] sm:$0xff]
      %v683 = vld [vmem:[%s664 + $0x90] sm:$0xff]
      %v684 = vld [vmem:[%s664 + $0x98] sm:$0xff]
      %v685 = vld [vmem:[%s664 + $0xa0] sm:$0xff]
      %v686 = vld [vmem:[%s664 + $0xa8] sm:$0xff]
      %v687 = vld [vmem:[%s664 + $0xb0] sm:$0xff]
      %v688 = vld [vmem:[%s664 + $0xb8] sm:$0xff]
      %v689 = vld [vmem:[%s664 + $0xc0] sm:$0xff]
      %v690 = vld [vmem:[%s664 + $0xc8] sm:$0xff]
      %v691 = vld [vmem:[%s664 + $0xd0] sm:$0xff]
      %v692 = vld [vmem:[%s664 + $0xd8] sm:$0xff]
      %v693 = vld [vmem:[%s664 + $0xe0] sm:$0xff]
      %v694 = vld [vmem:[%s664 + $0xe8] sm:$0xff]
      %v695 = vld [vmem:[%s664 + $0xf0] sm:$0xff]
      %v696 = vld [vmem:[%s664 + $0xf8] sm:$0xff]
      %v697 = vld [vmem:[%s664 + $0x100] sm:$0xff]
      %v698 = vld [vmem:[%s664 + $0x108] sm:$0xff]
      %v699 = vld [vmem:[%s664 + $0x110] sm:$0xff]
      %v700 = vld [vmem:[%s664 + $0x118] sm:$0xff]
      %v701 = vld [vmem:[%s664 + $0x120] sm:$0xff]
      %v702 = vld [vmem:[%s664 + $0x128] sm:$0xff]
      %v703 = vld [vmem:[%s664 + $0x130] sm:$0xff]
      %v704 = vld [vmem:[%s664 + $0x138] sm:$0xff]
      %v705 = vld [vmem:[%s664 + $0x140] sm:$0xff]
      %v706 = vld [vmem:[%s664 + $0x148] sm:$0xff]
      %v707 = vld [vmem:[%s664 + $0x150] sm:$0xff]
      %v708 = vld [vmem:[%s664 + $0x158] sm:$0xff]
      %v709 = vld [vmem:[%s664 + $0x160] sm:$0xff]
      %v710 = vld [vmem:[%s664 + $0x168] sm:$0xff]
      %v711 = vld [vmem:[%s664 + $0x170] sm:$0xff]
      %v712 = vld [vmem:[%s664 + $0x178] sm:$0xff]
      %713 = vmatpush.msra.mxu0 %v680
      %714 = vmatpush.msra.mxu0 %v679
      %715 = vmatpush.msra.mxu0 %v678
      %716 = vmatpush.msra.mxu0 %v677
      %717 = vmatpush.msra.mxu0 %v676
      %718 = vmatpush.msra.mxu0 %v675
      %719 = vmatpush.msra.mxu0 %v674
      %720 = vmatpush.msra.mxu0 %v673
      %721 = vmatpush.msra.mxu0 %v672
      %722 = vmatpush.msra.mxu0 %v671
      %723 = vmatpush.msra.mxu0 %v670
      %724 = vmatpush.msra.mxu0 %v669
      %725 = vmatpush.msra.mxu0 %v668
      %726 = vmatpush.msra.mxu0 %v667
      %727 = vmatpush.msra.mxu0 %v666
      %728 = vmatpush.msra.mxu0 %v665
      %729 = vmatmul.f32.gmra.mxu0 %v202
      %v730 = vpop.f32.mrf.mxu0
      %v731 = vadd.f32 0.0, %v730
      %732 = vmatmul.f32.gmra.mxu0 %v203
      %v733 = vpop.f32.mrf.mxu0
      %v734 = vadd.f32 0.0, %v733
      %735 = vmatmul.f32.gmra.mxu0 %v205
      %v736 = vpop.f32.mrf.mxu0
      %v737 = vadd.f32 0.0, %v736
      %738 = vmatmul.f32.gmra.mxu0 %v206
      %v739 = vpop.f32.mrf.mxu0
      %v740 = vadd.f32 0.0, %v739
      %741 = vmatmul.f32.gmra.mxu0 %v208
      %v742 = vpop.f32.mrf.mxu0
      %v743 = vadd.f32 0.0, %v742
      %744 = vmatmul.f32.gmra.mxu0 %v209
      %v745 = vpop.f32.mrf.mxu0
      %v746 = vadd.f32 0.0, %v745
      %747 = vmatmul.f32.gmra.mxu0 %v211
      %v748 = vpop.f32.mrf.mxu0
      %v749 = vadd.f32 0.0, %v748
      %750 = vmatmul.f32.gmra.mxu0 %v212
      %v751 = vpop.f32.mrf.mxu0
      %v752 = vadd.f32 0.0, %v751
      %753 = vmatmul.f32.gmra.mxu0 %v214
      %v754 = vpop.f32.mrf.mxu0
      %v755 = vadd.f32 0.0, %v754
      %756 = vmatmul.f32.gmra.mxu0 %v215
      %v757 = vpop.f32.mrf.mxu0
      %v758 = vadd.f32 0.0, %v757
      %759 = vmatmul.f32.gmra.mxu0 %v217
      %v760 = vpop.f32.mrf.mxu0
      %v761 = vadd.f32 0.0, %v760
      %762 = vmatmul.f32.gmra.mxu0 %v218
      %v763 = vpop.f32.mrf.mxu0
      %v764 = vadd.f32 0.0, %v763
      %765 = vmatmul.f32.gmra.mxu0 %v220
      %v766 = vpop.f32.mrf.mxu0
      %v767 = vadd.f32 0.0, %v766
      %768 = vmatmul.f32.gmra.mxu0 %v221
      %v769 = vpop.f32.mrf.mxu0
      %v770 = vadd.f32 0.0, %v769
      %771 = vmatmul.f32.gmra.mxu0 %v223
      %v772 = vpop.f32.mrf.mxu0
      %v773 = vadd.f32 0.0, %v772
      %774 = vmatmul.f32.gmra.mxu0 %v224
      %v775 = vpop.f32.mrf.mxu0
      %v776 = vadd.f32 0.0, %v775
      %777 = vdwg.mxu0
      %778 = vmatpush.msra.mxu0 %v696
      %779 = vmatpush.msra.mxu0 %v695
      %780 = vmatpush.msra.mxu0 %v694
      %781 = vmatpush.msra.mxu0 %v693
      %782 = vmatpush.msra.mxu0 %v692
      %783 = vmatpush.msra.mxu0 %v691
      %784 = vmatpush.msra.mxu0 %v690
      %785 = vmatpush.msra.mxu0 %v689
      %786 = vmatpush.msra.mxu0 %v688
      %787 = vmatpush.msra.mxu0 %v687
      %788 = vmatpush.msra.mxu0 %v686
      %789 = vmatpush.msra.mxu0 %v685
      %790 = vmatpush.msra.mxu0 %v684
      %791 = vmatpush.msra.mxu0 %v683
      %792 = vmatpush.msra.mxu0 %v682
      %793 = vmatpush.msra.mxu0 %v681
      %794 = vmatmul.f32.gmra.mxu0 %v267
      %v795 = vpop.f32.mrf.mxu0
      %v796 = vadd.f32 %v731, %v795
      %797 = vmatmul.f32.gmra.mxu0 %v269
      %v798 = vpop.f32.mrf.mxu0
      %v799 = vadd.f32 %v734, %v798
      %800 = vmatmul.f32.gmra.mxu0 %v272
      %v801 = vpop.f32.mrf.mxu0
      %v802 = vadd.f32 %v737, %v801
      %803 = vmatmul.f32.gmra.mxu0 %v274
      %v804 = vpop.f32.mrf.mxu0
      %v805 = vadd.f32 %v740, %v804
      %806 = vmatmul.f32.gmra.mxu0 %v277
      %v807 = vpop.f32.mrf.mxu0
      %v808 = vadd.f32 %v743, %v807
      %809 = vmatmul.f32.gmra.mxu0 %v279
      %v810 = vpop.f32.mrf.mxu0
      %v811 = vadd.f32 %v746, %v810
      %812 = vmatmul.f32.gmra.mxu0 %v282
      %v813 = vpop.f32.mrf.mxu0
      %v814 = vadd.f32 %v749, %v813
      %815 = vmatmul.f32.gmra.mxu0 %v284
      %v816 = vpop.f32.mrf.mxu0
      %v817 = vadd.f32 %v752, %v816
      %818 = vmatmul.f32.gmra.mxu0 %v287
      %v819 = vpop.f32.mrf.mxu0
      %v820 = vadd.f32 %v755, %v819
      %821 = vmatmul.f32.gmra.mxu0 %v289
      %v822 = vpop.f32.mrf.mxu0
      %v823 = vadd.f32 %v758, %v822
      %824 = vmatmul.f32.gmra.mxu0 %v292
      %v825 = vpop.f32.mrf.mxu0
      %v826 = vadd.f32 %v761, %v825
      %827 = vmatmul.f32.gmra.mxu0 %v294
      %v828 = vpop.f32.mrf.mxu0
      %v829 = vadd.f32 %v764, %v828
      %830 = vmatmul.f32.gmra.mxu0 %v297
      %v831 = vpop.f32.mrf.mxu0
      %v832 = vadd.f32 %v767, %v831
      %833 = vmatmul.f32.gmra.mxu0 %v299
      %v834 = vpop.f32.mrf.mxu0
      %v835 = vadd.f32 %v770, %v834
      %836 = vmatmul.f32.gmra.mxu0 %v302
      %v837 = vpop.f32.mrf.mxu0
      %v838 = vadd.f32 %v773, %v837
      %839 = vmatmul.f32.gmra.mxu0 %v304
      %v840 = vpop.f32.mrf.mxu0
      %v841 = vadd.f32 %v776, %v840
      %842 = vdwg.mxu0
      %843 = vmatpush.msra.mxu0 %v712
      %844 = vmatpush.msra.mxu0 %v711
      %845 = vmatpush.msra.mxu0 %v710
      %846 = vmatpush.msra.mxu0 %v709
      %847 = vmatpush.msra.mxu0 %v708
      %848 = vmatpush.msra.mxu0 %v707
      %849 = vmatpush.msra.mxu0 %v706
      %850 = vmatpush.msra.mxu0 %v705
      %851 = vmatpush.msra.mxu0 %v704
      %852 = vmatpush.msra.mxu0 %v703
      %853 = vmatpush.msra.mxu0 %v702
      %854 = vmatpush.msra.mxu0 %v701
      %855 = vmatpush.msra.mxu0 %v700
      %856 = vmatpush.msra.mxu0 %v699
      %857 = vmatpush.msra.mxu0 %v698
      %858 = vmatpush.msra.mxu0 %v697
      %859 = vmatmul.f32.gmra.mxu0 %v338
      %v860 = vpop.f32.mrf.mxu0
      %v861 = vadd.f32 %v796, %v860
      %862 = vmatmul.f32.gmra.mxu0 %v340
      %v863 = vpop.f32.mrf.mxu0
      %v864 = vadd.f32 %v799, %v863
      %865 = vmatmul.f32.gmra.mxu0 %v343
      %v866 = vpop.f32.mrf.mxu0
      %v867 = vadd.f32 %v802, %v866
      %868 = vmatmul.f32.gmra.mxu0 %v345
      %v869 = vpop.f32.mrf.mxu0
      %v870 = vadd.f32 %v805, %v869
      %871 = vmatmul.f32.gmra.mxu0 %v348
      %v872 = vpop.f32.mrf.mxu0
      %v873 = vadd.f32 %v808, %v872
      %874 = vmatmul.f32.gmra.mxu0 %v350
      %v875 = vpop.f32.mrf.mxu0
      %v876 = vadd.f32 %v811, %v875
      %877 = vmatmul.f32.gmra.mxu0 %v353
      %v878 = vpop.f32.mrf.mxu0
      %v879 = vadd.f32 %v814, %v878
      %880 = vmatmul.f32.gmra.mxu0 %v355
      %v881 = vpop.f32.mrf.mxu0
      %v882 = vadd.f32 %v817, %v881
      %883 = vmatmul.f32.gmra.mxu0 %v358
      %v884 = vpop.f32.mrf.mxu0
      %v885 = vadd.f32 %v820, %v884
      %886 = vmatmul.f32.gmra.mxu0 %v360
      %v887 = vpop.f32.mrf.mxu0
      %v888 = vadd.f32 %v823, %v887
      %889 = vmatmul.f32.gmra.mxu0 %v363
      %v890 = vpop.f32.mrf.mxu0
      %v891 = vadd.f32 %v826, %v890
      %892 = vmatmul.f32.gmra.mxu0 %v365
      %v893 = vpop.f32.mrf.mxu0
      %v894 = vadd.f32 %v829, %v893
      %895 = vmatmul.f32.gmra.mxu0 %v368
      %v896 = vpop.f32.mrf.mxu0
      %v897 = vadd.f32 %v832, %v896
      %898 = vmatmul.f32.gmra.mxu0 %v370
      %v899 = vpop.f32.mrf.mxu0
      %v900 = vadd.f32 %v835, %v899
      %901 = vmatmul.f32.gmra.mxu0 %v373
      %v902 = vpop.f32.mrf.mxu0
      %v903 = vadd.f32 %v838, %v902
      %904 = vmatmul.f32.gmra.mxu0 %v375
      %v905 = vpop.f32.mrf.mxu0
      %v906 = vadd.f32 %v841, %v905
      %907 = vdwg.mxu0
      %v908 = vadd.f32 %v648, %v861
      %v909 = vadd.f32 %v649, %v864
      %v910 = vadd.f32 %v650, %v867
      %v911 = vadd.f32 %v651, %v870
      %v912 = vadd.f32 %v652, %v873
      %v913 = vadd.f32 %v653, %v876
      %v914 = vadd.f32 %v654, %v879
      %v915 = vadd.f32 %v655, %v882
      %v916 = vadd.f32 %v656, %v885
      %v917 = vadd.f32 %v657, %v888
      %v918 = vadd.f32 %v658, %v891
      %v919 = vadd.f32 %v659, %v894
      %v920 = vadd.f32 %v660, %v897
      %v921 = vadd.f32 %v661, %v900
      %v922 = vadd.f32 %v662, %v903
      %v923 = vadd.f32 %v663, %v906
      %s924 = scalar_lea.vmem %s1, 768
      %v925 = vld [vmem:[%s924] sm:$0xff]
      %v926 = vld [vmem:[%s924 + $0x8] sm:$0xff]
      %v927 = vld [vmem:[%s924 + $0x10] sm:$0xff]
      %v928 = vld [vmem:[%s924 + $0x18] sm:$0xff]
      %v929 = vld [vmem:[%s924 + $0x20] sm:$0xff]
      %v930 = vld [vmem:[%s924 + $0x28] sm:$0xff]
      %v931 = vld [vmem:[%s924 + $0x30] sm:$0xff]
      %v932 = vld [vmem:[%s924 + $0x38] sm:$0xff]
      %v933 = vld [vmem:[%s924 + $0x40] sm:$0xff]
      %v934 = vld [vmem:[%s924 + $0x48] sm:$0xff]
      %v935 = vld [vmem:[%s924 + $0x50] sm:$0xff]
      %v936 = vld [vmem:[%s924 + $0x58] sm:$0xff]
      %v937 = vld [vmem:[%s924 + $0x60] sm:$0xff]
      %v938 = vld [vmem:[%s924 + $0x68] sm:$0xff]
      %v939 = vld [vmem:[%s924 + $0x70] sm:$0xff]
      %v940 = vld [vmem:[%s924 + $0x78] sm:$0xff]
      %v941 = vld [vmem:[%s924 + $0x80] sm:$0xff]
      %v942 = vld [vmem:[%s924 + $0x88] sm:$0xff]
      %v943 = vld [vmem:[%s924 + $0x90] sm:$0xff]
      %v944 = vld [vmem:[%s924 + $0x98] sm:$0xff]
      %v945 = vld [vmem:[%s924 + $0xa0] sm:$0xff]
      %v946 = vld [vmem:[%s924 + $0xa8] sm:$0xff]
      %v947 = vld [vmem:[%s924 + $0xb0] sm:$0xff]
      %v948 = vld [vmem:[%s924 + $0xb8] sm:$0xff]
      %v949 = vld [vmem:[%s924 + $0xc0] sm:$0xff]
      %v950 = vld [vmem:[%s924 + $0xc8] sm:$0xff]
      %v951 = vld [vmem:[%s924 + $0xd0] sm:$0xff]
      %v952 = vld [vmem:[%s924 + $0xd8] sm:$0xff]
      %v953 = vld [vmem:[%s924 + $0xe0] sm:$0xff]
      %v954 = vld [vmem:[%s924 + $0xe8] sm:$0xff]
      %v955 = vld [vmem:[%s924 + $0xf0] sm:$0xff]
      %v956 = vld [vmem:[%s924 + $0xf8] sm:$0xff]
      %v957 = vld [vmem:[%s924 + $0x100] sm:$0xff]
      %v958 = vld [vmem:[%s924 + $0x108] sm:$0xff]
      %v959 = vld [vmem:[%s924 + $0x110] sm:$0xff]
      %v960 = vld [vmem:[%s924 + $0x118] sm:$0xff]
      %v961 = vld [vmem:[%s924 + $0x120] sm:$0xff]
      %v962 = vld [vmem:[%s924 + $0x128] sm:$0xff]
      %v963 = vld [vmem:[%s924 + $0x130] sm:$0xff]
      %v964 = vld [vmem:[%s924 + $0x138] sm:$0xff]
      %v965 = vld [vmem:[%s924 + $0x140] sm:$0xff]
      %v966 = vld [vmem:[%s924 + $0x148] sm:$0xff]
      %v967 = vld [vmem:[%s924 + $0x150] sm:$0xff]
      %v968 = vld [vmem:[%s924 + $0x158] sm:$0xff]
      %v969 = vld [vmem:[%s924 + $0x160] sm:$0xff]
      %v970 = vld [vmem:[%s924 + $0x168] sm:$0xff]
      %v971 = vld [vmem:[%s924 + $0x170] sm:$0xff]
      %v972 = vld [vmem:[%s924 + $0x178] sm:$0xff]
      %973 = vmatpush.msra.mxu0 %v940
      %974 = vmatpush.msra.mxu0 %v939
      %975 = vmatpush.msra.mxu0 %v938
      %976 = vmatpush.msra.mxu0 %v937
      %977 = vmatpush.msra.mxu0 %v936
      %978 = vmatpush.msra.mxu0 %v935
      %979 = vmatpush.msra.mxu0 %v934
      %980 = vmatpush.msra.mxu0 %v933
      %981 = vmatpush.msra.mxu0 %v932
      %982 = vmatpush.msra.mxu0 %v931
      %983 = vmatpush.msra.mxu0 %v930
      %984 = vmatpush.msra.mxu0 %v929
      %985 = vmatpush.msra.mxu0 %v928
      %986 = vmatpush.msra.mxu0 %v927
      %987 = vmatpush.msra.mxu0 %v926
      %988 = vmatpush.msra.mxu0 %v925
      %989 = vmatmul.f32.gmra.mxu0 %v205
      %v990 = vpop.f32.mrf.mxu0
      %v991 = vadd.f32 0.0, %v990
      %992 = vmatmul.f32.gmra.mxu0 %v206
      %v993 = vpop.f32.mrf.mxu0
      %v994 = vadd.f32 0.0, %v993
      %995 = vmatmul.f32.gmra.mxu0 %v208
      %v996 = vpop.f32.mrf.mxu0
      %v997 = vadd.f32 0.0, %v996
      %998 = vmatmul.f32.gmra.mxu0 %v209
      %v999 = vpop.f32.mrf.mxu0
      %v1000 = vadd.f32 0.0, %v999
      %1001 = vmatmul.f32.gmra.mxu0 %v211
      %v1002 = vpop.f32.mrf.mxu0
      %v1003 = vadd.f32 0.0, %v1002
      %1004 = vmatmul.f32.gmra.mxu0 %v212
      %v1005 = vpop.f32.mrf.mxu0
      %v1006 = vadd.f32 0.0, %v1005
      %1007 = vmatmul.f32.gmra.mxu0 %v214
      %v1008 = vpop.f32.mrf.mxu0
      %v1009 = vadd.f32 0.0, %v1008
      %1010 = vmatmul.f32.gmra.mxu0 %v215
      %v1011 = vpop.f32.mrf.mxu0
      %v1012 = vadd.f32 0.0, %v1011
      %1013 = vmatmul.f32.gmra.mxu0 %v217
      %v1014 = vpop.f32.mrf.mxu0
      %v1015 = vadd.f32 0.0, %v1014
      %1016 = vmatmul.f32.gmra.mxu0 %v218
      %v1017 = vpop.f32.mrf.mxu0
      %v1018 = vadd.f32 0.0, %v1017
      %1019 = vmatmul.f32.gmra.mxu0 %v220
      %v1020 = vpop.f32.mrf.mxu0
      %v1021 = vadd.f32 0.0, %v1020
      %1022 = vmatmul.f32.gmra.mxu0 %v221
      %v1023 = vpop.f32.mrf.mxu0
      %v1024 = vadd.f32 0.0, %v1023
      %1025 = vmatmul.f32.gmra.mxu0 %v223
      %v1026 = vpop.f32.mrf.mxu0
      %v1027 = vadd.f32 0.0, %v1026
      %1028 = vmatmul.f32.gmra.mxu0 %v224
      %v1029 = vpop.f32.mrf.mxu0
      %v1030 = vadd.f32 0.0, %v1029
      %1031 = vmatmul.f32.gmra.mxu0 %v226
      %v1032 = vpop.f32.mrf.mxu0
      %v1033 = vadd.f32 0.0, %v1032
      %1034 = vmatmul.f32.gmra.mxu0 %v227
      %v1035 = vpop.f32.mrf.mxu0
      %v1036 = vadd.f32 0.0, %v1035
      %1037 = vdwg.mxu0
      %1038 = vmatpush.msra.mxu0 %v956
      %1039 = vmatpush.msra.mxu0 %v955
      %1040 = vmatpush.msra.mxu0 %v954
      %1041 = vmatpush.msra.mxu0 %v953
      %1042 = vmatpush.msra.mxu0 %v952
      %1043 = vmatpush.msra.mxu0 %v951
      %1044 = vmatpush.msra.mxu0 %v950
      %1045 = vmatpush.msra.mxu0 %v949
      %1046 = vmatpush.msra.mxu0 %v948
      %1047 = vmatpush.msra.mxu0 %v947
      %1048 = vmatpush.msra.mxu0 %v946
      %1049 = vmatpush.msra.mxu0 %v945
      %1050 = vmatpush.msra.mxu0 %v944
      %1051 = vmatpush.msra.mxu0 %v943
      %1052 = vmatpush.msra.mxu0 %v942
      %1053 = vmatpush.msra.mxu0 %v941
      %1054 = vmatmul.f32.gmra.mxu0 %v272
      %v1055 = vpop.f32.mrf.mxu0
      %v1056 = vadd.f32 %v991, %v1055
      %1057 = vmatmul.f32.gmra.mxu0 %v274
      %v1058 = vpop.f32.mrf.mxu0
      %v1059 = vadd.f32 %v994, %v1058
      %1060 = vmatmul.f32.gmra.mxu0 %v277
      %v1061 = vpop.f32.mrf.mxu0
      %v1062 = vadd.f32 %v997, %v1061
      %1063 = vmatmul.f32.gmra.mxu0 %v279
      %v1064 = vpop.f32.mrf.mxu0
      %v1065 = vadd.f32 %v1000, %v1064
      %1066 = vmatmul.f32.gmra.mxu0 %v282
      %v1067 = vpop.f32.mrf.mxu0
      %v1068 = vadd.f32 %v1003, %v1067
      %1069 = vmatmul.f32.gmra.mxu0 %v284
      %v1070 = vpop.f32.mrf.mxu0
      %v1071 = vadd.f32 %v1006, %v1070
      %1072 = vmatmul.f32.gmra.mxu0 %v287
      %v1073 = vpop.f32.mrf.mxu0
      %v1074 = vadd.f32 %v1009, %v1073
      %1075 = vmatmul.f32.gmra.mxu0 %v289
      %v1076 = vpop.f32.mrf.mxu0
      %v1077 = vadd.f32 %v1012, %v1076
      %1078 = vmatmul.f32.gmra.mxu0 %v292
      %v1079 = vpop.f32.mrf.mxu0
      %v1080 = vadd.f32 %v1015, %v1079
      %1081 = vmatmul.f32.gmra.mxu0 %v294
      %v1082 = vpop.f32.mrf.mxu0
      %v1083 = vadd.f32 %v1018, %v1082
      %1084 = vmatmul.f32.gmra.mxu0 %v297
      %v1085 = vpop.f32.mrf.mxu0
      %v1086 = vadd.f32 %v1021, %v1085
      %1087 = vmatmul.f32.gmra.mxu0 %v299
      %v1088 = vpop.f32.mrf.mxu0
      %v1089 = vadd.f32 %v1024, %v1088
      %1090 = vmatmul.f32.gmra.mxu0 %v302
      %v1091 = vpop.f32.mrf.mxu0
      %v1092 = vadd.f32 %v1027, %v1091
      %1093 = vmatmul.f32.gmra.mxu0 %v304
      %v1094 = vpop.f32.mrf.mxu0
      %v1095 = vadd.f32 %v1030, %v1094
      %1096 = vmatmul.f32.gmra.mxu0 %v307
      %v1097 = vpop.f32.mrf.mxu0
      %v1098 = vadd.f32 %v1033, %v1097
      %1099 = vmatmul.f32.gmra.mxu0 %v309
      %v1100 = vpop.f32.mrf.mxu0
      %v1101 = vadd.f32 %v1036, %v1100
      %1102 = vdwg.mxu0
      %1103 = vmatpush.msra.mxu0 %v972
      %1104 = vmatpush.msra.mxu0 %v971
      %1105 = vmatpush.msra.mxu0 %v970
      %1106 = vmatpush.msra.mxu0 %v969
      %1107 = vmatpush.msra.mxu0 %v968
      %1108 = vmatpush.msra.mxu0 %v967
      %1109 = vmatpush.msra.mxu0 %v966
      %1110 = vmatpush.msra.mxu0 %v965
      %1111 = vmatpush.msra.mxu0 %v964
      %1112 = vmatpush.msra.mxu0 %v963
      %1113 = vmatpush.msra.mxu0 %v962
      %1114 = vmatpush.msra.mxu0 %v961
      %1115 = vmatpush.msra.mxu0 %v960
      %1116 = vmatpush.msra.mxu0 %v959
      %1117 = vmatpush.msra.mxu0 %v958
      %1118 = vmatpush.msra.mxu0 %v957
      %1119 = vmatmul.f32.gmra.mxu0 %v343
      %v1120 = vpop.f32.mrf.mxu0
      %v1121 = vadd.f32 %v1056, %v1120
      %1122 = vmatmul.f32.gmra.mxu0 %v345
      %v1123 = vpop.f32.mrf.mxu0
      %v1124 = vadd.f32 %v1059, %v1123
      %1125 = vmatmul.f32.gmra.mxu0 %v348
      %v1126 = vpop.f32.mrf.mxu0
      %v1127 = vadd.f32 %v1062, %v1126
      %1128 = vmatmul.f32.gmra.mxu0 %v350
      %v1129 = vpop.f32.mrf.mxu0
      %v1130 = vadd.f32 %v1065, %v1129
      %1131 = vmatmul.f32.gmra.mxu0 %v353
      %v1132 = vpop.f32.mrf.mxu0
      %v1133 = vadd.f32 %v1068, %v1132
      %1134 = vmatmul.f32.gmra.mxu0 %v355
      %v1135 = vpop.f32.mrf.mxu0
      %v1136 = vadd.f32 %v1071, %v1135
      %1137 = vmatmul.f32.gmra.mxu0 %v358
      %v1138 = vpop.f32.mrf.mxu0
      %v1139 = vadd.f32 %v1074, %v1138
      %1140 = vmatmul.f32.gmra.mxu0 %v360
      %v1141 = vpop.f32.mrf.mxu0
      %v1142 = vadd.f32 %v1077, %v1141
      %1143 = vmatmul.f32.gmra.mxu0 %v363
      %v1144 = vpop.f32.mrf.mxu0
      %v1145 = vadd.f32 %v1080, %v1144
      %1146 = vmatmul.f32.gmra.mxu0 %v365
      %v1147 = vpop.f32.mrf.mxu0
      %v1148 = vadd.f32 %v1083, %v1147
      %1149 = vmatmul.f32.gmra.mxu0 %v368
      %v1150 = vpop.f32.mrf.mxu0
      %v1151 = vadd.f32 %v1086, %v1150
      %1152 = vmatmul.f32.gmra.mxu0 %v370
      %v1153 = vpop.f32.mrf.mxu0
      %v1154 = vadd.f32 %v1089, %v1153
      %1155 = vmatmul.f32.gmra.mxu0 %v373
      %v1156 = vpop.f32.mrf.mxu0
      %v1157 = vadd.f32 %v1092, %v1156
      %1158 = vmatmul.f32.gmra.mxu0 %v375
      %v1159 = vpop.f32.mrf.mxu0
      %v1160 = vadd.f32 %v1095, %v1159
      %1161 = vmatmul.f32.gmra.mxu0 %v378
      %v1162 = vpop.f32.mrf.mxu0
      %v1163 = vadd.f32 %v1098, %v1162
      %1164 = vmatmul.f32.gmra.mxu0 %v380
      %v1165 = vpop.f32.mrf.mxu0
      %v1166 = vadd.f32 %v1101, %v1165
      %1167 = vdwg.mxu0
      %v1168 = vadd.f32 %v908, %v1121
      %v1169 = vadd.f32 %v909, %v1124
      %v1170 = vadd.f32 %v910, %v1127
      %v1171 = vadd.f32 %v911, %v1130
      %v1172 = vadd.f32 %v912, %v1133
      %v1173 = vadd.f32 %v913, %v1136
      %v1174 = vadd.f32 %v914, %v1139
      %v1175 = vadd.f32 %v915, %v1142
      %v1176 = vadd.f32 %v916, %v1145
      %v1177 = vadd.f32 %v917, %v1148
      %v1178 = vadd.f32 %v918, %v1151
      %v1179 = vadd.f32 %v919, %v1154
      %v1180 = vadd.f32 %v920, %v1157
      %v1181 = vadd.f32 %v921, %v1160
      %v1182 = vadd.f32 %v922, %v1163
      %v1183 = vadd.f32 %v923, %v1166
      %v1184 = vmax.f32 %v1168, 0.0
      %v1185 = vmax.f32 %v1169, 0.0
      %v1186 = vmax.f32 %v1170, 0.0
      %v1187 = vmax.f32 %v1171, 0.0
      %v1188 = vmax.f32 %v1172, 0.0
      %v1189 = vmax.f32 %v1173, 0.0
      %v1190 = vmax.f32 %v1174, 0.0
      %v1191 = vmax.f32 %v1175, 0.0
      %v1192 = vmax.f32 %v1176, 0.0
      %v1193 = vmax.f32 %v1177, 0.0
      %v1194 = vmax.f32 %v1178, 0.0
      %v1195 = vmax.f32 %v1179, 0.0
      %v1196 = vmax.f32 %v1180, 0.0
      %v1197 = vmax.f32 %v1181, 0.0
      %v1198 = vmax.f32 %v1182, 0.0
      %v1199 = vmax.f32 %v1183, 0.0
      %1200 = vst [vmem:[%s194] sm:$0xff] %v1184
      %1201 = vst [vmem:[%s194 + $0x8] sm:$0xff] %v1185
      %1202 = vst [vmem:[%s194 + $0x10] sm:$0xff] %v1186
      %1203 = vst [vmem:[%s194 + $0x18] sm:$0xff] %v1187
      %1204 = vst [vmem:[%s194 + $0x20] sm:$0xff] %v1188
      %1205 = vst [vmem:[%s194 + $0x28] sm:$0xff] %v1189
      %1206 = vst [vmem:[%s194 + $0x30] sm:$0xff] %v1190
      %1207 = vst [vmem:[%s194 + $0x38] sm:$0xff] %v1191
      %1208 = vst [vmem:[%s194 + $0x40] sm:$0xff] %v1192
      %1209 = vst [vmem:[%s194 + $0x48] sm:$0xff] %v1193
      %1210 = vst [vmem:[%s194 + $0x50] sm:$0xff] %v1194
      %1211 = vst [vmem:[%s194 + $0x58] sm:$0xff] %v1195
      %1212 = vst [vmem:[%s194 + $0x60] sm:$0xff] %v1196
      %1213 = vst [vmem:[%s194 + $0x68] sm:$0xff] %v1197
      %1214 = vst [vmem:[%s194 + $0x70] sm:$0xff] %v1198
      %1215 = vst [vmem:[%s194 + $0x78] sm:$0xff] %v1199
      %s1216 = smul.u32 8, %s19
      %p1217 = scmp.lt.s32.totalorder %s18, 1
      %s1218 = scalar_select %p1217, %s18, 1
      %p1219 = scmp.lt.s32.totalorder %s1216, 15
      %s1220 = scalar_select %p1219, %s1216, 15
      %s1221 = smul.addr %s1220, 2
      %s1222 = smul.addr %s1218, 32
      %s1223 = sadd.s32 %s1221, %s1222
      %s1224 = smul.addr %s1223, 8
      %s1225 = scalar_lea.vmem %s3, %s1224
      // Predicated region
      $region33: #{conv_bn_relu.1} parent=31 // pred_check
        %p1226 = pneg %p114
      $region34: #{conv_bn_relu.1} parent=31 // pred_check_branch
        %1228 = sbr.rel (%p1226) target = $region36
      $region35: #{conv_bn_relu.1} parent=31 // pred_region
        %s1229 = smul.u32 8, %s19
      $region36: #{conv_bn_relu.1} parent=31 // pred_fallthru
        _
    $region32: #{conv_bn_relu.1} parent=5 // pred_fallthru
      _
    %p1230 = scmp.le.s32.totalorder 2, %s9
    // Predicated region
    $region37: #{conv_bn_relu.1} parent=5 // pred_check
      %p1231 = pneg %p1230
    $region38: #{conv_bn_relu.1} parent=5 // pred_check_branch
      %1233 = sbr.rel (%p1231) target = $region40
    $region39: #{conv_bn_relu.1} parent=5 // pred_region
      %s1234 = ssub.s32 %s9, 2
      // Predicated region
      $region41: #{conv_bn_relu.1} parent=39 // pred_check
        %p1235 = pneg %p120
      $region42: #{conv_bn_relu.1} parent=39 // pred_check_branch
        %1237 = sbr.rel (%p1235) target = $region44
      $region43: #{conv_bn_relu.1} parent=39 // pred_region
        %s1238 = smul.u32 8, %s21
        %p1239 = scmp.lt.s32.totalorder %s20, 1
        %s1240 = scalar_select %p1239, %s20, 1
        %p1241 = scmp.lt.s32.totalorder %s1238, 15
        %s1242 = scalar_select %p1241, %s1238, 15
        %s1243 = smul.addr %s1242, 2
        %s1244 = smul.addr %s1240, 32
        %s1245 = sadd.s32 %s1243, %s1244
        %s1246 = smul.addr %s1245, 8
        %s1247 = scalar_lea.vmem %s3, %s1246
      $region44: #{conv_bn_relu.1} parent=39 // pred_fallthru
        _
    $region40: #{conv_bn_relu.1} parent=5 // pred_fallthru
      _
  $region6: #{conv_bn_relu.1} parent=0 // loop_footer
    %s13 = sadd.s32 1, %s9
  $region7: #{conv_bn_relu.1} parent=0 // loop_footer_branch
    %8 = sbr.rel target = $region3
  $region8: #{conv_bn_relu.1} parent=0 // loop_exit
    _

</llo_original>
